<compile_context>
chip_gen: v5e
topology: v5e:2x2
jax: 0.10.0
libtpu: 0.0.40
codegen_flags: <defaults>
</compile_context>

<pallas_src>
import jax
import jax.numpy as jnp
from jax.experimental import pallas as pl
from jax.experimental.pallas import tpu as pltpu


def _decoder_step_kernel(tok_ref,                       # scalar-prefetch: (T,) int32 in SMEM
                         emb_row_ref, h0_ref,           # (1,1,H) bf16, (1,H) f32
                         wih_ref, whh_ref,              # (3,H,H) bf16 (VMEM-resident)
                         bih_ref, bhh_ref,              # (3,1,H) f32
                         wout_ref, bout_ref,            # (H,V) bf16, (1,V) f32
                         logp_ref, hout_ref,            # (1,1,V) f32, (1,H) f32
                         h_scratch):                    # (1,H) f32 carry
    del tok_ref  # the token id is consumed by the emb-row index_map
    t = pl.program_id(0)

    @pl.when(t == 0)
    def _():
        h_scratch[...] = h0_ref[...]

    # Embedding row was gathered by the BlockSpec index_map; apply F.relu here.
    x = jnp.maximum(emb_row_ref[0], 0)                  # (1, H) bf16
    h = h_scratch[...]                                  # (1, H) f32
    h_bf = h.astype(jnp.bfloat16)

    # GRU gates, PyTorch order (r, z, n).  Each gate matrix is a lane-dense (H, H) tile
    # addressed along the leading dim -> no sub-128-lane slicing.
    def gate(g):
        gi = jnp.dot(x, wih_ref[g], preferred_element_type=jnp.float32) + bih_ref[g]
        gh = jnp.dot(h_bf, whh_ref[g], preferred_element_type=jnp.float32) + bhh_ref[g]
        return gi, gh

    i_r, h_r = gate(0)
    i_z, h_z = gate(1)
    i_n, h_n = gate(2)

    r = jax.nn.sigmoid(i_r + h_r)
    z = jax.nn.sigmoid(i_z + h_z)
    n = jnp.tanh(i_n + r * h_n)
    h_new = (1.0 - z) * n + z * h                       # (1, H) f32
    h_scratch[...] = h_new
    hout_ref[...] = h_new                               # resident block; written back at the end

    # Output projection + numerically stable LogSoftmax(dim=1).
    logits = jnp.dot(h_new.astype(jnp.bfloat16), wout_ref[...],
                     preferred_element_type=jnp.float32) + bout_ref[...]   # (1, V) f32
    m = jnp.max(logits, axis=-1, keepdims=True)
    shifted = logits - m
    lse = jnp.log(jnp.sum(jnp.exp(shifted), axis=-1, keepdims=True))
    logp_ref[0] = shifted - lse


def decoder_decode(tokens, hidden, params):
    """Run T teacher-forced decoder steps in one fused kernel.

    tokens: int32 (T,); hidden: (1, 1, H) f32.
    Returns (log_probs (T, V) f32, final hidden (1, 1, H) f32) — equivalent to calling
    Decoder.forward once per token, feeding the returned hidden forward.
    """
    T = int(tokens.shape[0])
    H = params["w_out"].shape[0]
    V = params["w_out"].shape[1]
    h0 = hidden.reshape(1, H).astype(jnp.float32)

    grid_spec = pltpu.PrefetchScalarGridSpec(
        num_scalar_prefetch=1,
        grid=(T,),
        in_specs=[
            # embedding row of token t (gathered in-kernel, prefetched by the pipeline)
            pl.BlockSpec((1, 1, H), lambda t, tok: (tok[t], 0, 0)),
            pl.BlockSpec((1, H), lambda t, tok: (0, 0)),            # h0
            pl.BlockSpec((3, H, H), lambda t, tok: (0, 0, 0)),      # w_ih  (resident)
            pl.BlockSpec((3, H, H), lambda t, tok: (0, 0, 0)),      # w_hh  (resident)
            pl.BlockSpec((3, 1, H), lambda t, tok: (0, 0, 0)),      # b_ih  (resident)
            pl.BlockSpec((3, 1, H), lambda t, tok: (0, 0, 0)),      # b_hh  (resident)
            pl.BlockSpec((H, V), lambda t, tok: (0, 0)),            # w_out (resident)
            pl.BlockSpec((1, V), lambda t, tok: (0, 0)),            # b_out (resident)
        ],
        out_specs=(
            pl.BlockSpec((1, 1, V), lambda t, tok: (t, 0, 0)),      # per-step log-probs
            pl.BlockSpec((1, H), lambda t, tok: (0, 0)),            # final hidden (resident)
        ),
        scratch_shapes=[pltpu.VMEM((1, H), jnp.float32)],           # hidden-state carry
    )

    logp, h_new = pl.pallas_call(
        _decoder_step_kernel,
        grid_spec=grid_spec,
        out_shape=(
            jax.ShapeDtypeStruct((T, 1, V), jnp.float32),
            jax.ShapeDtypeStruct((1, H), jnp.float32),
        ),
        compiler_params=pltpu.CompilerParams(
            dimension_semantics=("arbitrary",)),                    # sequential recurrence
    )(tokens.astype(jnp.int32), params["emb"], h0,
      params["w_ih"], params["w_hh"], params["b_ih"], params["b_hh"],
      params["w_out"], params["b_out"])

    return logp.reshape(T, V), h_new.reshape(1, 1, H)


def decoder_forward(input_idx, hidden, params):
    """Single step, matching Decoder.forward(input, hidden) exactly.
    input_idx: int32 (1, 1); hidden: (1, 1, H).  Returns ((1, V) log-probs, (1, 1, H) hidden)."""
    logp, h_new = decoder_decode(input_idx.reshape((1,)), hidden, params)
    return logp, h_new


def init_params(key, hidden_size, output_size):
    """PyTorch-style init: Embedding ~ N(0,1); GRU/Linear ~ U(-1/sqrt(H), 1/sqrt(H)).
    Big matrices stored bf16 (halves weight-streaming bytes); biases f32."""
    H, V = hidden_size, output_size
    k = 1.0 / jnp.sqrt(jnp.float32(H))
    keys = jax.random.split(key, 7)

    def u(kk, shape):
        return jax.random.uniform(kk, shape, jnp.float32, minval=-k, maxval=k)

    return {
        # (V, 1, H): a single-row gather block (1, 1, H) has full-extent, lane-dense last dims.
        "emb":   jax.random.normal(keys[0], (V, 1, H), jnp.float32).astype(jnp.bfloat16),
        # (gate, in, out), gate order (r, z, n); transposed vs PyTorch weight_ih_l0 (3H, H).
        "w_ih":  u(keys[1], (3, H, H)).astype(jnp.bfloat16),
        "w_hh":  u(keys[2], (3, H, H)).astype(jnp.bfloat16),
        "b_ih":  u(keys[3], (3, 1, H)),
        "b_hh":  u(keys[4], (3, 1, H)),
        # Linear stored (in, out).
        "w_out": u(keys[5], (H, V)).astype(jnp.bfloat16),
        "b_out": u(keys[6], (1, V)),
    }


def _ref_decode(tokens, hidden, params):
    """Pure-JAX reference of the same math (bf16 weights, f32 accumulation)."""
    H = params["w_out"].shape[0]
    emb = params["emb"].reshape(-1, H)
    h = hidden.reshape(1, H).astype(jnp.float32)
    logps = []
    for t in range(int(tokens.shape[0])):
        x = jnp.maximum(emb[tokens[t]].reshape(1, H), 0)
        hb = h.astype(jnp.bfloat16)
        gi = [jnp.dot(x, params["w_ih"][g], preferred_element_type=jnp.float32)
              + params["b_ih"][g] for g in range(3)]
        gh = [jnp.dot(hb, params["w_hh"][g], preferred_element_type=jnp.float32)
              + params["b_hh"][g] for g in range(3)]
        r = jax.nn.sigmoid(gi[0] + gh[0])
        z = jax.nn.sigmoid(gi[1] + gh[1])
        n = jnp.tanh(gi[2] + r * gh[2])
        h = (1.0 - z) * n + z * h
        logits = jnp.dot(h.astype(jnp.bfloat16), params["w_out"],
                         preferred_element_type=jnp.float32) + params["b_out"]
        logps.append(jax.nn.log_softmax(logits, axis=-1))
    return jnp.concatenate(logps, axis=0), h.reshape(1, 1, H)


if __name__ == "__main__":
    hidden_size = 128    # lane-aligned (multiple of 128)
    output_size = 256    # vocab size, lane-aligned

    key = jax.random.PRNGKey(0)
    params = init_params(key, hidden_size, output_size)

    hidden = jnp.zeros((1, 1, hidden_size), jnp.float32)   # Decoder.initHidden()

    # Fused multi-token decode: weights stay VMEM-resident across all T steps.
    tokens = jnp.array([5, 17, 42, 7], dtype=jnp.int32)
    log_probs_seq, final_hidden = decoder_decode(tokens, hidden, params)
    jax.block_until_ready((log_probs_seq, final_hidden))

    # Single-step call matching Decoder.forward(input, hidden).
    input_idx = jnp.array([[5]], dtype=jnp.int32)
    log_probs, new_hidden = decoder_forward(input_idx, hidden, params)
    jax.block_until_ready((log_probs, new_hidden))

    # Shape / semantics checks.
    assert log_probs_seq.shape == (tokens.shape[0], output_size)
    assert final_hidden.shape == (1, 1, hidden_size)
    assert log_probs.shape == (1, output_size)
    assert new_hidden.shape == (1, 1, hidden_size)
    # LogSoftmax sanity: probabilities sum to 1 for every step.
    assert jnp.allclose(jnp.sum(jnp.exp(log_probs)), 1.0, atol=1e-3)
    assert jnp.allclose(jnp.sum(jnp.exp(log_probs_seq), axis=-1), 1.0, atol=1e-3)
    # First fused step == standalone single step.
    assert jnp.allclose(log_probs_seq[0], log_probs[0], atol=1e-4)
    # Match the pure-JAX reference of the recurrence.
    ref_logp, ref_h = _ref_decode(tokens, hidden, params)
    assert jnp.allclose(log_probs_seq, ref_logp, atol=1e-2)
    assert jnp.allclose(final_hidden, ref_h, atol=1e-2)

    print("KERNEL_OK")
</pallas_src>

<mosaic_0001>
module attributes {stable_mosaic.version = 11 : i64} {
  func.func @_decoder_step_kernel(%arg0: i32, %arg1: memref<4xi32, #tpu.memory_space<smem>>, %arg2: memref<1x1x128xbf16, #tpu.memory_space<vmem>>, %arg3: memref<1x128xf32, #tpu.memory_space<vmem>>, %arg4: memref<3x128x128xbf16, #tpu.memory_space<vmem>>, %arg5: memref<3x128x128xbf16, #tpu.memory_space<vmem>>, %arg6: memref<3x1x128xf32, #tpu.memory_space<vmem>>, %arg7: memref<3x1x128xf32, #tpu.memory_space<vmem>>, %arg8: memref<128x256xbf16, #tpu.memory_space<vmem>>, %arg9: memref<1x256xf32, #tpu.memory_space<vmem>>, %arg10: memref<1x1x256xf32, #tpu.memory_space<vmem>>, %arg11: memref<1x128xf32, #tpu.memory_space<vmem>>, %arg12: memref<1x128xf32, #tpu.memory_space<vmem>>) attributes {dimension_semantics = [#tpu.dimension_semantics<arbitrary>], iteration_bounds = array<i64: 4>, scalar_prefetch = 1 : i64, scratch_operands = 1 : i64, tpu.core_type = #tpu.core_type<tc>, window_params = [{transform_indices = @transform_0, window_bounds = array<i64: 1, 1, 128>}, {pipeline_mode = #tpu.pipeline_mode<synchronous>, transform_indices = @transform_1, window_bounds = array<i64: 1, 128>}, {pipeline_mode = #tpu.pipeline_mode<synchronous>, transform_indices = @transform_2, window_bounds = array<i64: 3, 128, 128>}, {pipeline_mode = #tpu.pipeline_mode<synchronous>, transform_indices = @transform_3, window_bounds = array<i64: 3, 128, 128>}, {pipeline_mode = #tpu.pipeline_mode<synchronous>, transform_indices = @transform_4, window_bounds = array<i64: 3, 1, 128>}, {pipeline_mode = #tpu.pipeline_mode<synchronous>, transform_indices = @transform_5, window_bounds = array<i64: 3, 1, 128>}, {pipeline_mode = #tpu.pipeline_mode<synchronous>, transform_indices = @transform_6, window_bounds = array<i64: 128, 256>}, {pipeline_mode = #tpu.pipeline_mode<synchronous>, transform_indices = @transform_7, window_bounds = array<i64: 1, 256>}, {transform_indices = @transform_8, window_bounds = array<i64: 1, 1, 256>}, {pipeline_mode = #tpu.pipeline_mode<synchronous>, transform_indices = @transform_9, window_bounds = array<i64: 1, 128>}]} {
    %c0_i32 = arith.constant 0 : i32
    %0 = arith.cmpi eq, %arg0, %c0_i32 : i32
    %1 = arith.extui %0 : i1 to i32
    %c0_i32_0 = arith.constant 0 : i32
    %2 = arith.cmpi ne, %1, %c0_i32_0 : i32
    scf.if %2 {
      %c0_62 = arith.constant 0 : index
      %c0_63 = arith.constant 0 : index
      %85 = vector.load %arg3[%c0_62, %c0_63] : memref<1x128xf32, #tpu.memory_space<vmem>>, vector<1x128xf32>
      %c0_64 = arith.constant 0 : index
      %c0_65 = arith.constant 0 : index
      %86 = vector.load %arg12[%c0_64, %c0_65] : memref<1x128xf32, #tpu.memory_space<vmem>>, vector<1x128xf32>
      tpu.vector_store %arg12[%c0_64, %c0_65], %85 {strides = array<i32>} : memref<1x128xf32, #tpu.memory_space<vmem>>, vector<1x128xf32>,
    } else {
    }
    %c0 = arith.constant 0 : index
    %c0_1 = arith.constant 0 : index
    %c0_2 = arith.constant 0 : index
    %3 = vector.load %arg2[%c0, %c0_1, %c0_2] : memref<1x1x128xbf16, #tpu.memory_space<vmem>>, vector<1x1x128xbf16>
    %4 = vector.shape_cast %3 : vector<1x1x128xbf16> to vector<1x128xbf16>
    %cst = arith.constant 0.000000e+00 : bf16
    %5 = vector.broadcast %cst : bf16 to vector<1x128xbf16>
    %6 = arith.maximumf %4, %5 : vector<1x128xbf16>
    %c0_3 = arith.constant 0 : index
    %c0_4 = arith.constant 0 : index
    %7 = vector.load %arg12[%c0_3, %c0_4] : memref<1x128xf32, #tpu.memory_space<vmem>>, vector<1x128xf32>
    %8 = arith.truncf %7 : vector<1x128xf32> to vector<1x128xbf16>
    %c0_5 = arith.constant 0 : index
    %c0_6 = arith.constant 0 : index
    %c0_7 = arith.constant 0 : index
    %9 = vector.load %arg4[%c0_5, %c0_6, %c0_7] : memref<3x128x128xbf16, #tpu.memory_space<vmem>>, vector<1x128x128xbf16>
    %10 = vector.shape_cast %9 : vector<1x128x128xbf16> to vector<128x128xbf16>
    %cst_8 = arith.constant dense<0.000000e+00> : vector<1x128xf32>
    %11 = tpu.matmul %6, %10, %cst_8 {dimension_numbers = #tpu.dot_dimension_numbers<[1], [0], [0], [1], [0, 0, 1, 1], [], []>} : vector<1x128xbf16>, vector<128x128xbf16>, vector<1x128xf32> -> vector<1x128xf32>
    %c0_9 = arith.constant 0 : index
    %c0_10 = arith.constant 0 : index
    %c0_11 = arith.constant 0 : index
    %12 = vector.load %arg6[%c0_9, %c0_10, %c0_11] : memref<3x1x128xf32, #tpu.memory_space<vmem>>, vector<1x1x128xf32>
    %13 = vector.shape_cast %12 : vector<1x1x128xf32> to vector<1x128xf32>
    %14 = arith.addf %11, %13 : vector<1x128xf32>
    %c0_12 = arith.constant 0 : index
    %c0_13 = arith.constant 0 : index
    %c0_14 = arith.constant 0 : index
    %15 = vector.load %arg5[%c0_12, %c0_13, %c0_14] : memref<3x128x128xbf16, #tpu.memory_space<vmem>>, vector<1x128x128xbf16>
    %16 = vector.shape_cast %15 : vector<1x128x128xbf16> to vector<128x128xbf16>
    %cst_15 = arith.constant dense<0.000000e+00> : vector<1x128xf32>
    %17 = tpu.matmul %8, %16, %cst_15 {dimension_numbers = #tpu.dot_dimension_numbers<[1], [0], [0], [1], [0, 0, 1, 1], [], []>} : vector<1x128xbf16>, vector<128x128xbf16>, vector<1x128xf32> -> vector<1x128xf32>
    %c0_16 = arith.constant 0 : index
    %c0_17 = arith.constant 0 : index
    %c0_18 = arith.constant 0 : index
    %18 = vector.load %arg7[%c0_16, %c0_17, %c0_18] : memref<3x1x128xf32, #tpu.memory_space<vmem>>, vector<1x1x128xf32>
    %19 = vector.shape_cast %18 : vector<1x1x128xf32> to vector<1x128xf32>
    %20 = arith.addf %17, %19 : vector<1x128xf32>
    %c1 = arith.constant 1 : index
    %c0_19 = arith.constant 0 : index
    %c0_20 = arith.constant 0 : index
    %21 = vector.load %arg4[%c1, %c0_19, %c0_20] : memref<3x128x128xbf16, #tpu.memory_space<vmem>>, vector<1x128x128xbf16>
    %22 = vector.shape_cast %21 : vector<1x128x128xbf16> to vector<128x128xbf16>
    %cst_21 = arith.constant dense<0.000000e+00> : vector<1x128xf32>
    %23 = tpu.matmul %6, %22, %cst_21 {dimension_numbers = #tpu.dot_dimension_numbers<[1], [0], [0], [1], [0, 0, 1, 1], [], []>} : vector<1x128xbf16>, vector<128x128xbf16>, vector<1x128xf32> -> vector<1x128xf32>
    %c1_22 = arith.constant 1 : index
    %c0_23 = arith.constant 0 : index
    %c0_24 = arith.constant 0 : index
    %24 = vector.load %arg6[%c1_22, %c0_23, %c0_24] : memref<3x1x128xf32, #tpu.memory_space<vmem>>, vector<1x1x128xf32>
    %25 = vector.shape_cast %24 : vector<1x1x128xf32> to vector<1x128xf32>
    %26 = arith.addf %23, %25 : vector<1x128xf32>
    %c1_25 = arith.constant 1 : index
    %c0_26 = arith.constant 0 : index
    %c0_27 = arith.constant 0 : index
    %27 = vector.load %arg5[%c1_25, %c0_26, %c0_27] : memref<3x128x128xbf16, #tpu.memory_space<vmem>>, vector<1x128x128xbf16>
    %28 = vector.shape_cast %27 : vector<1x128x128xbf16> to vector<128x128xbf16>
    %cst_28 = arith.constant dense<0.000000e+00> : vector<1x128xf32>
    %29 = tpu.matmul %8, %28, %cst_28 {dimension_numbers = #tpu.dot_dimension_numbers<[1], [0], [0], [1], [0, 0, 1, 1], [], []>} : vector<1x128xbf16>, vector<128x128xbf16>, vector<1x128xf32> -> vector<1x128xf32>
    %c1_29 = arith.constant 1 : index
    %c0_30 = arith.constant 0 : index
    %c0_31 = arith.constant 0 : index
    %30 = vector.load %arg7[%c1_29, %c0_30, %c0_31] : memref<3x1x128xf32, #tpu.memory_space<vmem>>, vector<1x1x128xf32>
    %31 = vector.shape_cast %30 : vector<1x1x128xf32> to vector<1x128xf32>
    %32 = arith.addf %29, %31 : vector<1x128xf32>
    %c2 = arith.constant 2 : index
    %c0_32 = arith.constant 0 : index
    %c0_33 = arith.constant 0 : index
    %33 = vector.load %arg4[%c2, %c0_32, %c0_33] : memref<3x128x128xbf16, #tpu.memory_space<vmem>>, vector<1x128x128xbf16>
    %34 = vector.shape_cast %33 : vector<1x128x128xbf16> to vector<128x128xbf16>
    %cst_34 = arith.constant dense<0.000000e+00> : vector<1x128xf32>
    %35 = tpu.matmul %6, %34, %cst_34 {dimension_numbers = #tpu.dot_dimension_numbers<[1], [0], [0], [1], [0, 0, 1, 1], [], []>} : vector<1x128xbf16>, vector<128x128xbf16>, vector<1x128xf32> -> vector<1x128xf32>
    %c2_35 = arith.constant 2 : index
    %c0_36 = arith.constant 0 : index
    %c0_37 = arith.constant 0 : index
    %36 = vector.load %arg6[%c2_35, %c0_36, %c0_37] : memref<3x1x128xf32, #tpu.memory_space<vmem>>, vector<1x1x128xf32>
    %37 = vector.shape_cast %36 : vector<1x1x128xf32> to vector<1x128xf32>
    %38 = arith.addf %35, %37 : vector<1x128xf32>
    %c2_38 = arith.constant 2 : index
    %c0_39 = arith.constant 0 : index
    %c0_40 = arith.constant 0 : index
    %39 = vector.load %arg5[%c2_38, %c0_39, %c0_40] : memref<3x128x128xbf16, #tpu.memory_space<vmem>>, vector<1x128x128xbf16>
    %40 = vector.shape_cast %39 : vector<1x128x128xbf16> to vector<128x128xbf16>
    %cst_41 = arith.constant dense<0.000000e+00> : vector<1x128xf32>
    %41 = tpu.matmul %8, %40, %cst_41 {dimension_numbers = #tpu.dot_dimension_numbers<[1], [0], [0], [1], [0, 0, 1, 1], [], []>} : vector<1x128xbf16>, vector<128x128xbf16>, vector<1x128xf32> -> vector<1x128xf32>
    %c2_42 = arith.constant 2 : index
    %c0_43 = arith.constant 0 : index
    %c0_44 = arith.constant 0 : index
    %42 = vector.load %arg7[%c2_42, %c0_43, %c0_44] : memref<3x1x128xf32, #tpu.memory_space<vmem>>, vector<1x1x128xf32>
    %43 = vector.shape_cast %42 : vector<1x1x128xf32> to vector<1x128xf32>
    %44 = arith.addf %41, %43 : vector<1x128xf32>
    %45 = arith.addf %14, %20 : vector<1x128xf32>
    %46 = arith.negf %45 : vector<1x128xf32>
    %47 = math.exp %46 : vector<1x128xf32>
    %cst_45 = arith.constant 1.000000e+00 : f32
    %48 = vector.broadcast %cst_45 : f32 to vector<1x128xf32>
    %49 = arith.addf %48, %47 : vector<1x128xf32>
    %50 = arith.divf %48, %49 : vector<1x128xf32>
    %51 = arith.addf %26, %32 : vector<1x128xf32>
    %52 = arith.negf %51 : vector<1x128xf32>
    %53 = math.exp %52 : vector<1x128xf32>
    %cst_46 = arith.constant 1.000000e+00 : f32
    %54 = vector.broadcast %cst_46 : f32 to vector<1x128xf32>
    %55 = arith.addf %54, %53 : vector<1x128xf32>
    %56 = arith.divf %54, %55 : vector<1x128xf32>
    %57 = arith.mulf %50, %44 : vector<1x128xf32>
    %58 = arith.addf %38, %57 : vector<1x128xf32>
    %59 = math.tanh %58 : vector<1x128xf32>
    %cst_47 = arith.constant 1.000000e+00 : f32
    %60 = vector.broadcast %cst_47 : f32 to vector<1x128xf32>
    %61 = arith.subf %60, %56 : vector<1x128xf32>
    %62 = arith.mulf %61, %59 : vector<1x128xf32>
    %63 = arith.mulf %56, %7 : vector<1x128xf32>
    %64 = arith.addf %62, %63 : vector<1x128xf32>
    %c0_48 = arith.constant 0 : index
    %c0_49 = arith.constant 0 : index
    %65 = vector.load %arg12[%c0_48, %c0_49] : memref<1x128xf32, #tpu.memory_space<vmem>>, vector<1x128xf32>
    tpu.vector_store %arg12[%c0_48, %c0_49], %64 {strides = array<i32>} : memref<1x128xf32, #tpu.memory_space<vmem>>, vector<1x128xf32>,
    %c0_50 = arith.constant 0 : index
    %c0_51 = arith.constant 0 : index
    %66 = vector.load %arg11[%c0_50, %c0_51] : memref<1x128xf32, #tpu.memory_space<vmem>>, vector<1x128xf32>
    tpu.vector_store %arg11[%c0_50, %c0_51], %64 {strides = array<i32>} : memref<1x128xf32, #tpu.memory_space<vmem>>, vector<1x128xf32>,
    %67 = arith.truncf %64 : vector<1x128xf32> to vector<1x128xbf16>
    %c0_52 = arith.constant 0 : index
    %c0_53 = arith.constant 0 : index
    %68 = vector.load %arg8[%c0_52, %c0_53] : memref<128x256xbf16, #tpu.memory_space<vmem>>, vector<128x256xbf16>
    %cst_54 = arith.constant dense<0.000000e+00> : vector<1x256xf32>
    %69 = tpu.matmul %67, %68, %cst_54 {dimension_numbers = #tpu.dot_dimension_numbers<[1], [0], [0], [1], [0, 0, 1, 1], [], []>} : vector<1x128xbf16>, vector<128x256xbf16>, vector<1x256xf32> -> vector<1x256xf32>
    %c0_55 = arith.constant 0 : index
    %c0_56 = arith.constant 0 : index
    %70 = vector.load %arg9[%c0_55, %c0_56] : memref<1x256xf32, #tpu.memory_space<vmem>>, vector<1x256xf32>
    %71 = arith.addf %69, %70 : vector<1x256xf32>
    %cst_57 = arith.constant dense<0xFF800000> : vector<1xf32>
    %72 = vector.multi_reduction <maximumf>, %71, %cst_57 [1] : vector<1x256xf32> to vector<1xf32>
    %73 = vector.shape_cast %72 : vector<1xf32> to vector<1x1xf32>
    %74 = vector.broadcast %73 : vector<1x1xf32> to vector<1x256xf32>
    %75 = arith.subf %71, %74 : vector<1x256xf32>
    %76 = math.exp %75 : vector<1x256xf32>
    %cst_58 = arith.constant dense<0.000000e+00> : vector<1xf32>
    %77 = vector.multi_reduction <add>, %76, %cst_58 [1] : vector<1x256xf32> to vector<1xf32>
    %78 = vector.shape_cast %77 : vector<1xf32> to vector<1x1xf32>
    %79 = math.log %78 : vector<1x1xf32>
    %80 = vector.broadcast %79 : vector<1x1xf32> to vector<1x256xf32>
    %81 = arith.subf %75, %80 : vector<1x256xf32>
    %c0_59 = arith.constant 0 : index
    %c0_60 = arith.constant 0 : index
    %c0_61 = arith.constant 0 : index
    %82 = vector.load %arg10[%c0_59, %c0_60, %c0_61] : memref<1x1x256xf32, #tpu.memory_space<vmem>>, vector<1x1x256xf32>
    %83 = vector.shape_cast %82 : vector<1x1x256xf32> to vector<1x256xf32>
    %84 = vector.shape_cast %81 : vector<1x256xf32> to vector<1x1x256xf32>
    tpu.vector_store %arg10[%c0_59, %c0_60, %c0_61], %84 {strides = array<i32>} : memref<1x1x256xf32, #tpu.memory_space<vmem>>, vector<1x1x256xf32>,
    return
  }
  func.func @transform_0(%arg0: i32, %arg1: memref<4xi32, #tpu.memory_space<smem>>) -> (i32, i32, i32) {
    %0 = arith.index_cast %arg0 : i32 to index
    %1 = memref.load %arg1[%0] : memref<4xi32, #tpu.memory_space<smem>>
    %c0_i32 = arith.constant 0 : i32
    %c0_i32_0 = arith.constant 0 : i32
    %c0_i32_1 = arith.constant 0 : i32
    return %1, %c0_i32, %c0_i32_0 : i32, i32, i32
  }
  func.func @transform_1(%arg0: i32, %arg1: memref<4xi32, #tpu.memory_space<smem>>) -> (i32, i32) {
    %c0_i32 = arith.constant 0 : i32
    %c0_i32_0 = arith.constant 0 : i32
    %c0_i32_1 = arith.constant 0 : i32
    return %c0_i32, %c0_i32_0 : i32, i32
  }
  func.func @transform_2(%arg0: i32, %arg1: memref<4xi32, #tpu.memory_space<smem>>) -> (i32, i32, i32) {
    %c0_i32 = arith.constant 0 : i32
    %c0_i32_0 = arith.constant 0 : i32
    %c0_i32_1 = arith.constant 0 : i32
    %c0_i32_2 = arith.constant 0 : i32
    return %c0_i32, %c0_i32_0, %c0_i32_1 : i32, i32, i32
  }
  func.func @transform_3(%arg0: i32, %arg1: memref<4xi32, #tpu.memory_space<smem>>) -> (i32, i32, i32) {
    %c0_i32 = arith.constant 0 : i32
    %c0_i32_0 = arith.constant 0 : i32
    %c0_i32_1 = arith.constant 0 : i32
    %c0_i32_2 = arith.constant 0 : i32
    return %c0_i32, %c0_i32_0, %c0_i32_1 : i32, i32, i32
  }
  func.func @transform_4(%arg0: i32, %arg1: memref<4xi32, #tpu.memory_space<smem>>) -> (i32, i32, i32) {
    %c0_i32 = arith.constant 0 : i32
    %c0_i32_0 = arith.constant 0 : i32
    %c0_i32_1 = arith.constant 0 : i32
    %c0_i32_2 = arith.constant 0 : i32
    return %c0_i32, %c0_i32_0, %c0_i32_1 : i32, i32, i32
  }
  func.func @transform_5(%arg0: i32, %arg1: memref<4xi32, #tpu.memory_space<smem>>) -> (i32, i32, i32) {
    %c0_i32 = arith.constant 0 : i32
    %c0_i32_0 = arith.constant 0 : i32
    %c0_i32_1 = arith.constant 0 : i32
    %c0_i32_2 = arith.constant 0 : i32
    return %c0_i32, %c0_i32_0, %c0_i32_1 : i32, i32, i32
  }
  func.func @transform_6(%arg0: i32, %arg1: memref<4xi32, #tpu.memory_space<smem>>) -> (i32, i32) {
    %c0_i32 = arith.constant 0 : i32
    %c0_i32_0 = arith.constant 0 : i32
    %c0_i32_1 = arith.constant 0 : i32
    return %c0_i32, %c0_i32_0 : i32, i32
  }
  func.func @transform_7(%arg0: i32, %arg1: memref<4xi32, #tpu.memory_space<smem>>) -> (i32, i32) {
    %c0_i32 = arith.constant 0 : i32
    %c0_i32_0 = arith.constant 0 : i32
    %c0_i32_1 = arith.constant 0 : i32
    return %c0_i32, %c0_i32_0 : i32, i32
  }
  func.func @transform_8(%arg0: i32, %arg1: memref<4xi32, #tpu.memory_space<smem>>) -> (i32, i32, i32) {
    %c0_i32 = arith.constant 0 : i32
    %c0_i32_0 = arith.constant 0 : i32
    %c0_i32_1 = arith.constant 0 : i32
    return %arg0, %c0_i32, %c0_i32_0 : i32, i32, i32
  }
  func.func @transform_9(%arg0: i32, %arg1: memref<4xi32, #tpu.memory_space<smem>>) -> (i32, i32) {
    %c0_i32 = arith.constant 0 : i32
    %c0_i32_0 = arith.constant 0 : i32
    %c0_i32_1 = arith.constant 0 : i32
    return %c0_i32, %c0_i32_0 : i32, i32
  }
}

</mosaic_0001>

<llo_original>
// kernel: tpu_custom_call.1
$region0: #{tpu_custom_call.1}
  #allocation0 [shape = 'u32[]', space=smem, size = 0x4, offset = 0x4, fixed_abs, tag = 'smem constant byte address 0x4 - core index']
  #allocation1 [shape = 'u32[72,128]{1,0:T(1,128)}', space=vmem, size = 0x9000, scoped, tag = 'internal scratch']
  #allocation2 [shape = 'f32[1,128]{1,0:T(1,128)}', space=vmem, size = 0x200, scoped, tag = 'scratch operand']
  #allocation3 [shape = 's32[1]{0}', space=sflag, size = 0x4, scoped, tag = 'scoped memory for tpu_custom_call.1']
  #allocation4 [shape = 'u8[512]{0}', space=smem, size = 0x200, scoped, tag = 'prefetched SMEM operand 0']
  %s0 = inlined_call_operand.hbm [shape: s32[4], index: 0, kind: input, shape index: {}]
  %s1 = inlined_call_operand.vmem [shape: bf16[256,1,128], index: 1, kind: input, shape index: {}]
  %s2 = inlined_call_operand.hbm [shape: f32[1,128], index: 2, kind: input, shape index: {}]
  %s3 = inlined_call_operand.vmem [shape: bf16[3,128,128], index: 3, kind: input, shape index: {}]
  %s4 = inlined_call_operand.vmem [shape: bf16[3,128,128], index: 4, kind: input, shape index: {}]
  %s5 = inlined_call_operand.vmem [shape: f32[3,1,128], index: 5, kind: input, shape index: {}]
  %s6 = inlined_call_operand.hbm [shape: f32[3,1,128], index: 6, kind: input, shape index: {}]
  %s7 = inlined_call_operand.hbm [shape: bf16[128,256], index: 7, kind: input, shape index: {}]
  %s8 = inlined_call_operand.hbm [shape: f32[1,256], index: 8, kind: input, shape index: {}]
  %s9 = inlined_call_operand.hbm [shape: f32[4,1,256], index: 9, kind: output, shape index: {0}]
  %s10 = inlined_call_operand.hbm [shape: f32[1,128], index: 10, kind: output, shape index: {1}]
  %11 = xla_tuple %s9, %s10
  %s12 = sld [smem:[#allocation0]]
  $region93: #{tpu_custom_call.1} parent=0
    _
  %s14 = ssub.s32 1, %s12
  %s15 = scalar_select 0, %s14, %s12
  %s17 = sshll.u32 %s0, 4
  %s18 = int_to_ptr.hbm [resolvable:$true] %s17
  %20 = dma.hbm_to_smem %s18, 16, [#allocation4], [#allocation3]
  %22 = dma.done [#allocation3], 16
  %23 = sfence
  $region1: #{tpu_custom_call.1} parent=0
    #allocation5 [shape = 'u8[512]{0}', space=vmem, size = 0x400, scoped, tag = 'input window, operand 2, single buffered']
    #allocation6 [shape = 's32[2]{0}', space=sflag, size = 0x8, scoped, tag = 'scoped memory for tpu_custom_call.1']
    #allocation7 [shape = 's32[2]{0}', space=sflag, size = 0x8, scoped, tag = 'scoped memory for tpu_custom_call.1']
    #allocation8 [shape = 'u8[1536]{0}', space=vmem, size = 0x800, scoped, tag = 'input window, operand 6, single buffered']
    #allocation9 [shape = 's32[1]{0}', space=sflag, size = 0x4, scoped, tag = 'scoped memory for tpu_custom_call.1']
    #allocation10 [shape = 'u8[65536]{0}', space=vmem, size = 0x10000, scoped, tag = 'input window, operand 7, single buffered']
    #allocation11 [shape = 'u8[1024]{0}', space=vmem, size = 0x400, scoped, tag = 'input window, operand 8, single buffered']
    #allocation12 [shape = 's32[1]{0}', space=sflag, size = 0x4, scoped, tag = 'scoped memory for tpu_custom_call.1']
    #allocation13 [shape = 'u8[2048]{0}', space=vmem, size = 0x800, scoped, tag = 'output window, operand 0']
    #allocation14 [shape = 'u8[512]{0}', space=vmem, size = 0x400, scoped, tag = 'output window, operand 1, single buffered']
    #allocation15 [shape = 's32[1]{0}', space=sflag, size = 0x4, scoped, tag = 'scoped memory for tpu_custom_call.1']
    %24 = vsyncpa [#allocation6], 0
    %25 = vsyncpa [#allocation9], 0
    %26 = vsyncpa [#allocation12], 0
    %27 = vsyncpa [#allocation7], 0
    %s28 = scalar_lea.sflag [#allocation7], 1
    %29 = vsyncpa %s28, 0
    %30 = vsyncpa [#allocation15], 0
    loop: start=0, step=1, limit=6
    $region2: #{tpu_custom_call.1} parent=1 // loop_pre_header
      _
    $region3: #{tpu_custom_call.1} parent=1 // loop_header
      %s32 = sphi 0, %s36
      %p33 = scmp.ge.s32.totalorder %s32, 6
      %s44 = sphi 0, %s46
      %s47 = sphi 0, %s44
      %s48 = sphi 0, %s47
      %s64 = sphi 0, %s48
      %s68 = sphi 0, %s68
      %s70 = sphi 0, %s68
      %s71 = sphi 0, %s70
      %s85 = sphi 0, %s71
      %s89 = sphi 0, %s89
      %s91 = sphi 0, %s89
      %s92 = sphi 0, %s91
      %s106 = sphi 0, %s92
      %s110 = sphi 0, %s110
      %s112 = sphi 0, %s110
      %s113 = sphi 0, %s112
      %s127 = sphi 0, %s113
      %s131 = sphi 0, %s131
      %s133 = sphi 0, %s131
      %s134 = sphi 0, %s133
      %s148 = sphi 0, %s134
      %s152 = sphi 0, %s152
      %s154 = sphi 0, %s152
      %s155 = sphi 0, %s154
      %s169 = sphi 0, %s155
      %s173 = sphi 0, %s173
      %s175 = sphi 0, %s173
      %s176 = sphi 0, %s175
      %s190 = sphi 0, %s176
      %s194 = sphi 0, %s194
      %s196 = sphi 0, %s194
      %s197 = sphi 0, %s196
      %s211 = sphi 0, %s197
      %s217 = sphi 0, %s219
      %s220 = sphi 0, %s217
      %s221 = sphi 0, %s220
      %s237 = sphi 0, %s221
      %s241 = sphi 0, %s241
      %s243 = sphi 0, %s241
      %s244 = sphi 0, %s243
      %s258 = sphi 0, %s244
    $region4: #{tpu_custom_call.1} parent=1 // loop_header_branch
      %35 = sbr.rel (%p33) target = $region8
    $region5: #{tpu_custom_call.1} parent=1 // loop_body
      %s37 = ssub.s32 %s32, 1
      %s38 = ssub.s32 %s32, 2
      %s39 = sadd.s32 %s32, 1
      %s40 = sld [smem:[#allocation4 + %s32]]
      %s41 = sld [smem:[#allocation4 + %s39]]
      %s42 = ssub.s32 %s40, %s41
      %p43 = scmp.eq.s32.totalorder %s42, 0
      %s45 = sadd.s32 %s44, 1
      %s46 = scalar_select %p43, %s44, %s45
      %p49 = pneg %p43
      %p50 = scmp.eq.s32.totalorder %s32, 3
      %p51 = por %p49, %p50
      %p52 = scmp.ne.s32.totalorder %s44, %s47
      %p53 = scmp.eq.s32.totalorder %s32, 0
      %p54 = por %p52, %p53
      %p55 = scmp.ne.s32.totalorder %s44, %s47
      %p56 = scmp.eq.s32.totalorder %s37, 3
      %p57 = por %p55, %p56
      %p58 = scmp.ne.s32.totalorder %s47, %s48
      %p59 = scmp.eq.s32.totalorder %s37, 0
      %p60 = por %p58, %p59
      %p61 = scmp.ne.s32.totalorder %s47, %s48
      %p62 = scmp.eq.s32.totalorder %s38, 3
      %p63 = por %p61, %p62
      %p65 = scmp.ne.s32.totalorder %s48, %s64
      %p66 = scmp.eq.s32.totalorder %s38, 0
      %p67 = por %p65, %p66
      %s69 = sadd.s32 %s68, 1
      %p72 = scmp.eq.s32.totalorder %s32, 3
      %p73 = scmp.ne.s32.totalorder %s68, %s70
      %p74 = scmp.eq.s32.totalorder %s32, 0
      %p75 = por %p73, %p74
      %p76 = scmp.ne.s32.totalorder %s68, %s70
      %p77 = scmp.eq.s32.totalorder %s37, 3
      %p78 = por %p76, %p77
      %p79 = scmp.ne.s32.totalorder %s70, %s71
      %p80 = scmp.eq.s32.totalorder %s37, 0
      %p81 = por %p79, %p80
      %p82 = scmp.ne.s32.totalorder %s70, %s71
      %p83 = scmp.eq.s32.totalorder %s38, 3
      %p84 = por %p82, %p83
      %p86 = scmp.ne.s32.totalorder %s71, %s85
      %p87 = scmp.eq.s32.totalorder %s38, 0
      %p88 = por %p86, %p87
      %s90 = sadd.s32 %s89, 1
      %p93 = scmp.eq.s32.totalorder %s32, 3
      %p94 = scmp.ne.s32.totalorder %s89, %s91
      %p95 = scmp.eq.s32.totalorder %s32, 0
      %p96 = por %p94, %p95
      %p97 = scmp.ne.s32.totalorder %s89, %s91
      %p98 = scmp.eq.s32.totalorder %s37, 3
      %p99 = por %p97, %p98
      %p100 = scmp.ne.s32.totalorder %s91, %s92
      %p101 = scmp.eq.s32.totalorder %s37, 0
      %p102 = por %p100, %p101
      %p103 = scmp.ne.s32.totalorder %s91, %s92
      %p104 = scmp.eq.s32.totalorder %s38, 3
      %p105 = por %p103, %p104
      %p107 = scmp.ne.s32.totalorder %s92, %s106
      %p108 = scmp.eq.s32.totalorder %s38, 0
      %p109 = por %p107, %p108
      %s111 = sadd.s32 %s110, 1
      %p114 = scmp.eq.s32.totalorder %s32, 3
      %p115 = scmp.ne.s32.totalorder %s110, %s112
      %p116 = scmp.eq.s32.totalorder %s32, 0
      %p117 = por %p115, %p116
      %p118 = scmp.ne.s32.totalorder %s110, %s112
      %p119 = scmp.eq.s32.totalorder %s37, 3
      %p120 = por %p118, %p119
      %p121 = scmp.ne.s32.totalorder %s112, %s113
      %p122 = scmp.eq.s32.totalorder %s37, 0
      %p123 = por %p121, %p122
      %p124 = scmp.ne.s32.totalorder %s112, %s113
      %p125 = scmp.eq.s32.totalorder %s38, 3
      %p126 = por %p124, %p125
      %p128 = scmp.ne.s32.totalorder %s113, %s127
      %p129 = scmp.eq.s32.totalorder %s38, 0
      %p130 = por %p128, %p129
      %s132 = sadd.s32 %s131, 1
      %p135 = scmp.eq.s32.totalorder %s32, 3
      %p136 = scmp.ne.s32.totalorder %s131, %s133
      %p137 = scmp.eq.s32.totalorder %s32, 0
      %p138 = por %p136, %p137
      %p139 = scmp.ne.s32.totalorder %s131, %s133
      %p140 = scmp.eq.s32.totalorder %s37, 3
      %p141 = por %p139, %p140
      %p142 = scmp.ne.s32.totalorder %s133, %s134
      %p143 = scmp.eq.s32.totalorder %s37, 0
      %p144 = por %p142, %p143
      %p145 = scmp.ne.s32.totalorder %s133, %s134
      %p146 = scmp.eq.s32.totalorder %s38, 3
      %p147 = por %p145, %p146
      %p149 = scmp.ne.s32.totalorder %s134, %s148
      %p150 = scmp.eq.s32.totalorder %s38, 0
      %p151 = por %p149, %p150
      %s153 = sadd.s32 %s152, 1
      %p156 = scmp.eq.s32.totalorder %s32, 3
      %p157 = scmp.ne.s32.totalorder %s152, %s154
      %p158 = scmp.eq.s32.totalorder %s32, 0
      %p159 = por %p157, %p158
      %p160 = scmp.ne.s32.totalorder %s152, %s154
      %p161 = scmp.eq.s32.totalorder %s37, 3
      %p162 = por %p160, %p161
      %p163 = scmp.ne.s32.totalorder %s154, %s155
      %p164 = scmp.eq.s32.totalorder %s37, 0
      %p165 = por %p163, %p164
      %p166 = scmp.ne.s32.totalorder %s154, %s155
      %p167 = scmp.eq.s32.totalorder %s38, 3
      %p168 = por %p166, %p167
      %p170 = scmp.ne.s32.totalorder %s155, %s169
      %p171 = scmp.eq.s32.totalorder %s38, 0
      %p172 = por %p170, %p171
      %s174 = sadd.s32 %s173, 1
      %p177 = scmp.eq.s32.totalorder %s32, 3
      %p178 = scmp.ne.s32.totalorder %s173, %s175
      %p179 = scmp.eq.s32.totalorder %s32, 0
      %p180 = por %p178, %p179
      %p181 = scmp.ne.s32.totalorder %s173, %s175
      %p182 = scmp.eq.s32.totalorder %s37, 3
      %p183 = por %p181, %p182
      %p184 = scmp.ne.s32.totalorder %s175, %s176
      %p185 = scmp.eq.s32.totalorder %s37, 0
      %p186 = por %p184, %p185
      %p187 = scmp.ne.s32.totalorder %s175, %s176
      %p188 = scmp.eq.s32.totalorder %s38, 3
      %p189 = por %p187, %p188
      %p191 = scmp.ne.s32.totalorder %s176, %s190
      %p192 = scmp.eq.s32.totalorder %s38, 0
      %p193 = por %p191, %p192
      %s195 = sadd.s32 %s194, 1
      %p198 = scmp.eq.s32.totalorder %s32, 3
      %p199 = scmp.ne.s32.totalorder %s194, %s196
      %p200 = scmp.eq.s32.totalorder %s32, 0
      %p201 = por %p199, %p200
      %p202 = scmp.ne.s32.totalorder %s194, %s196
      %p203 = scmp.eq.s32.totalorder %s37, 3
      %p204 = por %p202, %p203
      %p205 = scmp.ne.s32.totalorder %s196, %s197
      %p206 = scmp.eq.s32.totalorder %s37, 0
      %p207 = por %p205, %p206
      %p208 = scmp.ne.s32.totalorder %s196, %s197
      %p209 = scmp.eq.s32.totalorder %s38, 3
      %p210 = por %p208, %p209
      %p212 = scmp.ne.s32.totalorder %s197, %s211
      %p213 = scmp.eq.s32.totalorder %s38, 0
      %p214 = por %p212, %p213
      %s215 = ssub.s32 %s32, %s39
      %p216 = scmp.eq.s32.totalorder %s215, 0
      %s218 = sadd.s32 %s217, 1
      %s219 = scalar_select %p216, %s217, %s218
      %p222 = pneg %p216
      %p223 = scmp.eq.s32.totalorder %s32, 3
      %p224 = por %p222, %p223
      %p225 = scmp.ne.s32.totalorder %s217, %s220
      %p226 = scmp.eq.s32.totalorder %s32, 0
      %p227 = por %p225, %p226
      %p228 = scmp.ne.s32.totalorder %s217, %s220
      %p229 = scmp.eq.s32.totalorder %s37, 3
      %p230 = por %p228, %p229
      %p231 = scmp.ne.s32.totalorder %s220, %s221
      %p232 = scmp.eq.s32.totalorder %s37, 0
      %p233 = por %p231, %p232
      %p234 = scmp.ne.s32.totalorder %s220, %s221
      %p235 = scmp.eq.s32.totalorder %s38, 3
      %p236 = por %p234, %p235
      %p238 = scmp.ne.s32.totalorder %s221, %s237
      %p239 = scmp.eq.s32.totalorder %s38, 0
      %p240 = por %p238, %p239
      %s242 = sadd.s32 %s241, 1
      %p245 = scmp.eq.s32.totalorder %s32, 3
      %p246 = scmp.ne.s32.totalorder %s241, %s243
      %p247 = scmp.eq.s32.totalorder %s32, 0
      %p248 = por %p246, %p247
      %p249 = scmp.ne.s32.totalorder %s241, %s243
      %p250 = scmp.eq.s32.totalorder %s37, 3
      %p251 = por %p249, %p250
      %p252 = scmp.ne.s32.totalorder %s243, %s244
      %p253 = scmp.eq.s32.totalorder %s37, 0
      %p254 = por %p252, %p253
      %p255 = scmp.ne.s32.totalorder %s243, %s244
      %p256 = scmp.eq.s32.totalorder %s38, 3
      %p257 = por %p255, %p256
      %p259 = scmp.ne.s32.totalorder %s244, %s258
      %p260 = scmp.eq.s32.totalorder %s38, 0
      %p261 = por %p259, %p260
      %p262 = scmp.le.s32.totalorder 1, %s32
      %p263 = scmp.lt.s32.totalorder %s32, 5
      %p264 = pnand %p262, %p263
      %p265 = pneg %p264
      // Predicated region
      $region9: #{tpu_custom_call.1} parent=5 // pred_check
        _
      $region10: #{tpu_custom_call.1} parent=5 // pred_check_branch
        %267 = sbr.rel (%p264) target = $region12
      $region11: #{tpu_custom_call.1} parent=5 // pred_region
        %s268 = ssub.s32 %s32, 1
        // Predicated region
        $region13: #{tpu_custom_call.1} parent=11 // pred_check
          %p269 = pneg %p81
        $region14: #{tpu_custom_call.1} parent=11 // pred_check_branch
          %271 = sbr.rel (%p269) target = $region16
        $region15: #{tpu_custom_call.1} parent=11 // pred_region
          %273 = vsyncadd [#allocation6], 0
          %s275 = sshll.u32 %s2, 4
          %s276 = int_to_ptr.hbm [resolvable:$true] %s275
          %s277 = sshll.u32 [#allocation5], 4
          %s278 = int_to_ptr.vmem [resolvable:$true] %s277
          %280 = dma.hbm_to_vmem [thread:$0]  %s276, 16, %s278, [#allocation6]
        $region16: #{tpu_custom_call.1} parent=11 // pred_fallthru
          _
        // Predicated region
        $region17: #{tpu_custom_call.1} parent=11 // pred_check
          %p281 = pneg %p102
        $region18: #{tpu_custom_call.1} parent=11 // pred_check_branch
          %283 = sbr.rel (%p281) target = $region20
        $region19: #{tpu_custom_call.1} parent=11 // pred_region
          _
        $region20: #{tpu_custom_call.1} parent=11 // pred_fallthru
          _
        // Predicated region
        $region21: #{tpu_custom_call.1} parent=11 // pred_check
          %p284 = pneg %p123
        $region22: #{tpu_custom_call.1} parent=11 // pred_check_branch
          %286 = sbr.rel (%p284) target = $region24
        $region23: #{tpu_custom_call.1} parent=11 // pred_region
          _
        $region24: #{tpu_custom_call.1} parent=11 // pred_fallthru
          _
        // Predicated region
        $region25: #{tpu_custom_call.1} parent=11 // pred_check
          %p287 = pneg %p144
        $region26: #{tpu_custom_call.1} parent=11 // pred_check_branch
          %289 = sbr.rel (%p287) target = $region28
        $region27: #{tpu_custom_call.1} parent=11 // pred_region
          _
        $region28: #{tpu_custom_call.1} parent=11 // pred_fallthru
          _
        // Predicated region
        $region29: #{tpu_custom_call.1} parent=11 // pred_check
          %p290 = pneg %p165
        $region30: #{tpu_custom_call.1} parent=11 // pred_check_branch
          %292 = sbr.rel (%p290) target = $region32
        $region31: #{tpu_custom_call.1} parent=11 // pred_region
          %294 = vsyncadd [#allocation9], 0
          %s295 = sshll.u32 %s6, 4
          %s296 = int_to_ptr.hbm [resolvable:$true] %s295
          %s297 = sshll.u32 [#allocation8], 4
          %s298 = int_to_ptr.vmem [resolvable:$true] %s297
          %303 = dma.hbm_to_vmem [thread:$0]  %s296, 48, %s298, [#allocation9], 16, 16, 1
        $region32: #{tpu_custom_call.1} parent=11 // pred_fallthru
          _
        // Predicated region
        $region33: #{tpu_custom_call.1} parent=11 // pred_check
          %p304 = pneg %p186
        $region34: #{tpu_custom_call.1} parent=11 // pred_check_branch
          %306 = sbr.rel (%p304) target = $region36
        $region35: #{tpu_custom_call.1} parent=11 // pred_region
          %308 = vsyncadd [#allocation9], 0
          %s309 = sshll.u32 %s7, 4
          %s310 = int_to_ptr.hbm [resolvable:$true] %s309
          %s311 = sshll.u32 [#allocation10], 4
          %s312 = int_to_ptr.vmem [resolvable:$true] %s311
          %317 = dma.hbm_to_vmem [thread:$0]  %s310, 2048, %s312, [#allocation9], 128, 128, 8
        $region36: #{tpu_custom_call.1} parent=11 // pred_fallthru
          _
        // Predicated region
        $region37: #{tpu_custom_call.1} parent=11 // pred_check
          %p318 = pneg %p207
        $region38: #{tpu_custom_call.1} parent=11 // pred_check_branch
          %320 = sbr.rel (%p318) target = $region40
        $region39: #{tpu_custom_call.1} parent=11 // pred_region
          %322 = vsyncadd [#allocation12], 0
          %s324 = sshll.u32 %s8, 4
          %s325 = int_to_ptr.hbm [resolvable:$true] %s324
          %s326 = sshll.u32 [#allocation11], 4
          %s327 = int_to_ptr.vmem [resolvable:$true] %s326
          %329 = dma.hbm_to_vmem [thread:$0]  %s325, 32, %s327, [#allocation12]
        $region40: #{tpu_custom_call.1} parent=11 // pred_fallthru
          _
      $region12: #{tpu_custom_call.1} parent=5 // pred_fallthru
        _
      %p330 = scmp.lt.s32.totalorder %s32, 4
      // Predicated region
      $region41: #{tpu_custom_call.1} parent=5 // pred_check
        %p331 = pneg %p330
      $region42: #{tpu_custom_call.1} parent=5 // pred_check_branch
        %333 = sbr.rel (%p331) target = $region44
      $region43: #{tpu_custom_call.1} parent=5 // pred_region
        // Predicated region
        $region45: #{tpu_custom_call.1} parent=43 // pred_check
          %p334 = pneg %p54
        $region46: #{tpu_custom_call.1} parent=43 // pred_check_branch
          %336 = sbr.rel (%p334) target = $region48
        $region47: #{tpu_custom_call.1} parent=43 // pred_region
          %s337 = sld [smem:[#allocation4 + %s32]]
          %p338 = scmp.lt.s32.totalorder %s337, 255
          %s339 = scalar_select %p338, %s337, 255
          %s340 = scalar_lea.vmem %s1, %s339
          %s341 = sld [smem:[#allocation4 + %s32]]
        $region48: #{tpu_custom_call.1} parent=43 // pred_fallthru
          _
      $region44: #{tpu_custom_call.1} parent=5 // pred_fallthru
        _
      %p342 = scmp.le.s32.totalorder 1, %s32
      %p343 = scmp.lt.s32.totalorder %s32, 5
      %p344 = pnand %p342, %p343
      %p345 = pneg %p344
      // Predicated region
      $region49: #{tpu_custom_call.1} parent=5 // pred_check
        _
      $region50: #{tpu_custom_call.1} parent=5 // pred_check_branch
        %347 = sbr.rel (%p344) target = $region52
      $region51: #{tpu_custom_call.1} parent=5 // pred_region
        %s348 = ssub.s32 %s32, 1
        // Predicated region
        $region53: #{tpu_custom_call.1} parent=51 // pred_check
          %p349 = pneg %p81
        $region54: #{tpu_custom_call.1} parent=51 // pred_check_branch
          %351 = sbr.rel (%p349) target = $region56
        $region55: #{tpu_custom_call.1} parent=51 // pred_region
          %353 = dma.done [#allocation6], 16
        $region56: #{tpu_custom_call.1} parent=51 // pred_fallthru
          _
        // Predicated region
        $region57: #{tpu_custom_call.1} parent=51 // pred_check
          %p354 = pneg %p165
        $region58: #{tpu_custom_call.1} parent=51 // pred_check_branch
          %356 = sbr.rel (%p354) target = $region60
        $region59: #{tpu_custom_call.1} parent=51 // pred_region
          %358 = dma.done [#allocation9], 48
        $region60: #{tpu_custom_call.1} parent=51 // pred_fallthru
          _
        // Predicated region
        $region61: #{tpu_custom_call.1} parent=51 // pred_check
          %p359 = pneg %p186
        $region62: #{tpu_custom_call.1} parent=51 // pred_check_branch
          %361 = sbr.rel (%p359) target = $region64
        $region63: #{tpu_custom_call.1} parent=51 // pred_region
          %363 = dma.done [#allocation9], 2048
        $region64: #{tpu_custom_call.1} parent=51 // pred_fallthru
          _
        // Predicated region
        $region65: #{tpu_custom_call.1} parent=51 // pred_check
          %p364 = pneg %p207
        $region66: #{tpu_custom_call.1} parent=51 // pred_check_branch
          %366 = sbr.rel (%p364) target = $region68
        $region67: #{tpu_custom_call.1} parent=51 // pred_region
          %368 = dma.done [#allocation12], 32
        $region68: #{tpu_custom_call.1} parent=51 // pred_fallthru
          _
        %s369 = sld [smem:[#allocation4 + %s37]]
        %p370 = scmp.lt.s32.totalorder %s369, 255
        %s371 = scalar_select %p370, %s369, 255
        %s372 = scalar_lea.vmem %s1, %s371
        %p373 = pneg %p60
        %p374 = pneg %p57
        %p375 = pneg %p81
        %p376 = pneg %p78
        %p377 = pneg %p102
        %p378 = pneg %p99
        %p379 = pneg %p123
        %p380 = pneg %p120
        %p381 = pneg %p144
        %p382 = pneg %p141
        %p383 = pneg %p165
        %p384 = pneg %p162
        %p385 = pneg %p186
        %p386 = pneg %p183
        %p387 = pneg %p207
        %p388 = pneg %p204
        %p389 = pneg %p233
        %p390 = pneg %p230
        %s391 = sand.u32 %s220, 1
        %s392 = scalar_lea.sflag [#allocation7], %s391
        %s393 = sand.u32 %s220, 1
        %s394 = smul.addr %s393, 2
        %s395 = scalar_lea.vmem [#allocation13], %s394
        %p396 = pneg %p254
        %p397 = pneg %p251
        %s398 = sld [smem:[#allocation4 + %s37]]
        %p399 = scmp.lt.s32.totalorder %s398, 255
        %s400 = scalar_select %p399, %s398, 255
        %s401 = scalar_lea.vmem %s1, %s400
        %s402 = sld [smem:[#allocation4 + %s37]]
        %p403 = scmp.eq.s32.totalorder %s37, 0
        // Predicated region
        $region69: #{tpu_custom_call.1} parent=51 // pred_check
          %p404 = pneg %p403
        $region70: #{tpu_custom_call.1} parent=51 // pred_check_branch
          %406 = sbr.rel (%p404) target = $region72
        $region71: #{tpu_custom_call.1} parent=51 // pred_region
          %v407 = vld [vmem:[#allocation5] sm:$0x1]
          %408 = vst [vmem:[#allocation2] sm:$0x1] %v407
        $region72: #{tpu_custom_call.1} parent=51 // pred_fallthru
          _
        %v409 = vld [vmem:[%s401] sm:$0x1]
        %v410 = vunpack.c.l.bf16 %v409
        %v411 = vmax.f32 %v410, 0.0
        %v412 = vpack.c.bf16 %v411, %v411
        %v413 = vld [vmem:[#allocation2] sm:$0x1]
        %v414 = vpack.c.bf16 %v413, %v413
        %v415 = vld [vmem:[%s3] sm:$0xf]
        %v416 = vld [vmem:[%s3 + $0x4] sm:$0xf]
        %v417 = vld [vmem:[%s3 + $0x8] sm:$0xf]
        %v418 = vld [vmem:[%s3 + $0xc] sm:$0xf]
        %v419 = vld [vmem:[%s3 + $0x10] sm:$0xf]
        %v420 = vld [vmem:[%s3 + $0x14] sm:$0xf]
        %v421 = vld [vmem:[%s3 + $0x18] sm:$0xf]
        %v422 = vld [vmem:[%s3 + $0x1c] sm:$0xf]
        %v423 = vld [vmem:[%s3 + $0x20] sm:$0xf]
        %v424 = vld [vmem:[%s3 + $0x24] sm:$0xf]
        %v425 = vld [vmem:[%s3 + $0x28] sm:$0xf]
        %v426 = vld [vmem:[%s3 + $0x2c] sm:$0xf]
        %v427 = vld [vmem:[%s3 + $0x30] sm:$0xf]
        %v428 = vld [vmem:[%s3 + $0x34] sm:$0xf]
        %v429 = vld [vmem:[%s3 + $0x38] sm:$0xf]
        %v430 = vld [vmem:[%s3 + $0x3c] sm:$0xf]
        %v431 = vld [vmem:[%s5] sm:$0x1]
        %v448 = vunpack.c.l.b16 %v415
        %v449 = vunpack.c.l.b16 %v416
        %v450 = vunpack.c.l.b16 %v417
        %v451 = vunpack.c.l.b16 %v418
        %v452 = vunpack.c.l.b16 %v419
        %v453 = vunpack.c.l.b16 %v420
        %v454 = vunpack.c.l.b16 %v421
        %v455 = vunpack.c.l.b16 %v422
        %v456 = vunpack.c.l.b16 %v423
        %v457 = vunpack.c.l.b16 %v424
        %v458 = vunpack.c.l.b16 %v425
        %v459 = vunpack.c.l.b16 %v426
        %v460 = vunpack.c.l.b16 %v427
        %v461 = vunpack.c.l.b16 %v428
        %v462 = vunpack.c.l.b16 %v429
        %v463 = vunpack.c.l.b16 %v430
        %v464 = vpack.c.b16 %v449, %v448
        %v465 = vpack.c.b16 %v451, %v450
        %v466 = vpack.c.b16 %v453, %v452
        %v467 = vpack.c.b16 %v455, %v454
        %v468 = vpack.c.b16 %v457, %v456
        %v469 = vpack.c.b16 %v459, %v458
        %v470 = vpack.c.b16 %v461, %v460
        %v471 = vpack.c.b16 %v463, %v462
        %480 = vmatpush.bf16.msra.mxu0 %v471
        %481 = vmatpush.bf16.msra.mxu0 %v470
        %482 = vmatpush.bf16.msra.mxu0 %v469
        %483 = vmatpush.bf16.msra.mxu0 %v468
        %484 = vmatpush.bf16.msra.mxu0 %v467
        %485 = vmatpush.bf16.msra.mxu0 %v466
        %486 = vmatpush.bf16.msra.mxu0 %v465
        %487 = vmatpush.bf16.msra.mxu0 %v464
        %488 = vmatmul.bf16.gmra.mxu0 %v412
        %v489 = vpop.f32.mrf.mxu0
        %v490 = vadd.f32 %v431, %v489
        %v491 = vpop.f32.mrf.mxu0
        %492 = vdwg.mxu0
        %v493 = vld [vmem:[%s4] sm:$0xf]
        %v494 = vld [vmem:[%s4 + $0x4] sm:$0xf]
        %v495 = vld [vmem:[%s4 + $0x8] sm:$0xf]
        %v496 = vld [vmem:[%s4 + $0xc] sm:$0xf]
        %v497 = vld [vmem:[%s4 + $0x10] sm:$0xf]
        %v498 = vld [vmem:[%s4 + $0x14] sm:$0xf]
        %v499 = vld [vmem:[%s4 + $0x18] sm:$0xf]
        %v500 = vld [vmem:[%s4 + $0x1c] sm:$0xf]
        %v501 = vld [vmem:[%s4 + $0x20] sm:$0xf]
        %v502 = vld [vmem:[%s4 + $0x24] sm:$0xf]
        %v503 = vld [vmem:[%s4 + $0x28] sm:$0xf]
        %v504 = vld [vmem:[%s4 + $0x2c] sm:$0xf]
        %v505 = vld [vmem:[%s4 + $0x30] sm:$0xf]
        %v506 = vld [vmem:[%s4 + $0x34] sm:$0xf]
        %v507 = vld [vmem:[%s4 + $0x38] sm:$0xf]
        %v508 = vld [vmem:[%s4 + $0x3c] sm:$0xf]
        %v509 = vld [vmem:[#allocation8] sm:$0x1]
        %v526 = vunpack.c.l.b16 %v493
        %v527 = vunpack.c.l.b16 %v494
        %v528 = vunpack.c.l.b16 %v495
        %v529 = vunpack.c.l.b16 %v496
        %v530 = vunpack.c.l.b16 %v497
        %v531 = vunpack.c.l.b16 %v498
        %v532 = vunpack.c.l.b16 %v499
        %v533 = vunpack.c.l.b16 %v500
        %v534 = vunpack.c.l.b16 %v501
        %v535 = vunpack.c.l.b16 %v502
        %v536 = vunpack.c.l.b16 %v503
        %v537 = vunpack.c.l.b16 %v504
        %v538 = vunpack.c.l.b16 %v505
        %v539 = vunpack.c.l.b16 %v506
        %v540 = vunpack.c.l.b16 %v507
        %v541 = vunpack.c.l.b16 %v508
        %v542 = vpack.c.b16 %v527, %v526
        %v543 = vpack.c.b16 %v529, %v528
        %v544 = vpack.c.b16 %v531, %v530
        %v545 = vpack.c.b16 %v533, %v532
        %v546 = vpack.c.b16 %v535, %v534
        %v547 = vpack.c.b16 %v537, %v536
        %v548 = vpack.c.b16 %v539, %v538
        %v549 = vpack.c.b16 %v541, %v540
        %558 = vmatpush.bf16.msra.mxu0 %v549
        %559 = vmatpush.bf16.msra.mxu0 %v548
        %560 = vmatpush.bf16.msra.mxu0 %v547
        %561 = vmatpush.bf16.msra.mxu0 %v546
        %562 = vmatpush.bf16.msra.mxu0 %v545
        %563 = vmatpush.bf16.msra.mxu0 %v544
        %564 = vmatpush.bf16.msra.mxu0 %v543
        %565 = vmatpush.bf16.msra.mxu0 %v542
        %566 = vmatmul.bf16.gmra.mxu0 %v414
        %v567 = vpop.f32.mrf.mxu0
        %v568 = vadd.f32 %v509, %v567
        %v569 = vpop.f32.mrf.mxu0
        %570 = vdwg.mxu0
        %s571 = scalar_lea.vmem %s3, 64
        %v572 = vld [vmem:[%s571] sm:$0xf]
        %v573 = vld [vmem:[%s571 + $0x4] sm:$0xf]
        %v574 = vld [vmem:[%s571 + $0x8] sm:$0xf]
        %v575 = vld [vmem:[%s571 + $0xc] sm:$0xf]
        %v576 = vld [vmem:[%s571 + $0x10] sm:$0xf]
        %v577 = vld [vmem:[%s571 + $0x14] sm:$0xf]
        %v578 = vld [vmem:[%s571 + $0x18] sm:$0xf]
        %v579 = vld [vmem:[%s571 + $0x1c] sm:$0xf]
        %v580 = vld [vmem:[%s571 + $0x20] sm:$0xf]
        %v581 = vld [vmem:[%s571 + $0x24] sm:$0xf]
        %v582 = vld [vmem:[%s571 + $0x28] sm:$0xf]
        %v583 = vld [vmem:[%s571 + $0x2c] sm:$0xf]
        %v584 = vld [vmem:[%s571 + $0x30] sm:$0xf]
        %v585 = vld [vmem:[%s571 + $0x34] sm:$0xf]
        %v586 = vld [vmem:[%s571 + $0x38] sm:$0xf]
        %v587 = vld [vmem:[%s571 + $0x3c] sm:$0xf]
        %s588 = scalar_lea.vmem %s5, 1
        %v589 = vld [vmem:[%s588] sm:$0x1]
        %v606 = vunpack.c.l.b16 %v572
        %v607 = vunpack.c.l.b16 %v573
        %v608 = vunpack.c.l.b16 %v574
        %v609 = vunpack.c.l.b16 %v575
        %v610 = vunpack.c.l.b16 %v576
        %v611 = vunpack.c.l.b16 %v577
        %v612 = vunpack.c.l.b16 %v578
        %v613 = vunpack.c.l.b16 %v579
        %v614 = vunpack.c.l.b16 %v580
        %v615 = vunpack.c.l.b16 %v581
        %v616 = vunpack.c.l.b16 %v582
        %v617 = vunpack.c.l.b16 %v583
        %v618 = vunpack.c.l.b16 %v584
        %v619 = vunpack.c.l.b16 %v585
        %v620 = vunpack.c.l.b16 %v586
        %v621 = vunpack.c.l.b16 %v587
        %v622 = vpack.c.b16 %v607, %v606
        %v623 = vpack.c.b16 %v609, %v608
        %v624 = vpack.c.b16 %v611, %v610
        %v625 = vpack.c.b16 %v613, %v612
        %v626 = vpack.c.b16 %v615, %v614
        %v627 = vpack.c.b16 %v617, %v616
        %v628 = vpack.c.b16 %v619, %v618
        %v629 = vpack.c.b16 %v621, %v620
        %638 = vmatpush.bf16.msra.mxu0 %v629
        %639 = vmatpush.bf16.msra.mxu0 %v628
        %640 = vmatpush.bf16.msra.mxu0 %v627
        %641 = vmatpush.bf16.msra.mxu0 %v626
        %642 = vmatpush.bf16.msra.mxu0 %v625
        %643 = vmatpush.bf16.msra.mxu0 %v624
        %644 = vmatpush.bf16.msra.mxu0 %v623
        %645 = vmatpush.bf16.msra.mxu0 %v622
        %646 = vmatmul.bf16.gmra.mxu0 %v412
        %v647 = vpop.f32.mrf.mxu0
        %v648 = vadd.f32 %v589, %v647
        %v649 = vpop.f32.mrf.mxu0
        %650 = vdwg.mxu0
        %s651 = scalar_lea.vmem %s4, 64
        %v652 = vld [vmem:[%s651] sm:$0xf]
        %v653 = vld [vmem:[%s651 + $0x4] sm:$0xf]
        %v654 = vld [vmem:[%s651 + $0x8] sm:$0xf]
        %v655 = vld [vmem:[%s651 + $0xc] sm:$0xf]
        %v656 = vld [vmem:[%s651 + $0x10] sm:$0xf]
        %v657 = vld [vmem:[%s651 + $0x14] sm:$0xf]
        %v658 = vld [vmem:[%s651 + $0x18] sm:$0xf]
        %v659 = vld [vmem:[%s651 + $0x1c] sm:$0xf]
        %v660 = vld [vmem:[%s651 + $0x20] sm:$0xf]
        %v661 = vld [vmem:[%s651 + $0x24] sm:$0xf]
        %v662 = vld [vmem:[%s651 + $0x28] sm:$0xf]
        %v663 = vld [vmem:[%s651 + $0x2c] sm:$0xf]
        %v664 = vld [vmem:[%s651 + $0x30] sm:$0xf]
        %v665 = vld [vmem:[%s651 + $0x34] sm:$0xf]
        %v666 = vld [vmem:[%s651 + $0x38] sm:$0xf]
        %v667 = vld [vmem:[%s651 + $0x3c] sm:$0xf]
        %s668 = scalar_lea.vmem [#allocation8], 1
        %v669 = vld [vmem:[%s668] sm:$0x1]
        %v686 = vunpack.c.l.b16 %v652
        %v687 = vunpack.c.l.b16 %v653
        %v688 = vunpack.c.l.b16 %v654
        %v689 = vunpack.c.l.b16 %v655
        %v690 = vunpack.c.l.b16 %v656
        %v691 = vunpack.c.l.b16 %v657
        %v692 = vunpack.c.l.b16 %v658
        %v693 = vunpack.c.l.b16 %v659
        %v694 = vunpack.c.l.b16 %v660
        %v695 = vunpack.c.l.b16 %v661
        %v696 = vunpack.c.l.b16 %v662
        %v697 = vunpack.c.l.b16 %v663
        %v698 = vunpack.c.l.b16 %v664
        %v699 = vunpack.c.l.b16 %v665
        %v700 = vunpack.c.l.b16 %v666
        %v701 = vunpack.c.l.b16 %v667
        %v702 = vpack.c.b16 %v687, %v686
        %v703 = vpack.c.b16 %v689, %v688
        %v704 = vpack.c.b16 %v691, %v690
        %v705 = vpack.c.b16 %v693, %v692
        %v706 = vpack.c.b16 %v695, %v694
        %v707 = vpack.c.b16 %v697, %v696
        %v708 = vpack.c.b16 %v699, %v698
        %v709 = vpack.c.b16 %v701, %v700
        %718 = vmatpush.bf16.msra.mxu0 %v709
        %719 = vmatpush.bf16.msra.mxu0 %v708
        %720 = vmatpush.bf16.msra.mxu0 %v707
        %721 = vmatpush.bf16.msra.mxu0 %v706
        %722 = vmatpush.bf16.msra.mxu0 %v705
        %723 = vmatpush.bf16.msra.mxu0 %v704
        %724 = vmatpush.bf16.msra.mxu0 %v703
        %725 = vmatpush.bf16.msra.mxu0 %v702
        %726 = vmatmul.bf16.gmra.mxu0 %v414
        %v727 = vpop.f32.mrf.mxu0
        %v728 = vadd.f32 %v669, %v727
        %v729 = vpop.f32.mrf.mxu0
        %730 = vdwg.mxu0
        %s731 = scalar_lea.vmem %s3, 128
        %v732 = vld [vmem:[%s731] sm:$0xf]
        %v733 = vld [vmem:[%s731 + $0x4] sm:$0xf]
        %v734 = vld [vmem:[%s731 + $0x8] sm:$0xf]
        %v735 = vld [vmem:[%s731 + $0xc] sm:$0xf]
        %v736 = vld [vmem:[%s731 + $0x10] sm:$0xf]
        %v737 = vld [vmem:[%s731 + $0x14] sm:$0xf]
        %v738 = vld [vmem:[%s731 + $0x18] sm:$0xf]
        %v739 = vld [vmem:[%s731 + $0x1c] sm:$0xf]
        %v740 = vld [vmem:[%s731 + $0x20] sm:$0xf]
        %v741 = vld [vmem:[%s731 + $0x24] sm:$0xf]
        %v742 = vld [vmem:[%s731 + $0x28] sm:$0xf]
        %v743 = vld [vmem:[%s731 + $0x2c] sm:$0xf]
        %v744 = vld [vmem:[%s731 + $0x30] sm:$0xf]
        %v745 = vld [vmem:[%s731 + $0x34] sm:$0xf]
        %v746 = vld [vmem:[%s731 + $0x38] sm:$0xf]
        %v747 = vld [vmem:[%s731 + $0x3c] sm:$0xf]
        %s748 = scalar_lea.vmem %s5, 2
        %v749 = vld [vmem:[%s748] sm:$0x1]
        %v766 = vunpack.c.l.b16 %v732
        %v767 = vunpack.c.l.b16 %v733
        %v768 = vunpack.c.l.b16 %v734
        %v769 = vunpack.c.l.b16 %v735
        %v770 = vunpack.c.l.b16 %v736
        %v771 = vunpack.c.l.b16 %v737
        %v772 = vunpack.c.l.b16 %v738
        %v773 = vunpack.c.l.b16 %v739
        %v774 = vunpack.c.l.b16 %v740
        %v775 = vunpack.c.l.b16 %v741
        %v776 = vunpack.c.l.b16 %v742
        %v777 = vunpack.c.l.b16 %v743
        %v778 = vunpack.c.l.b16 %v744
        %v779 = vunpack.c.l.b16 %v745
        %v780 = vunpack.c.l.b16 %v746
        %v781 = vunpack.c.l.b16 %v747
        %v782 = vpack.c.b16 %v767, %v766
        %v783 = vpack.c.b16 %v769, %v768
        %v784 = vpack.c.b16 %v771, %v770
        %v785 = vpack.c.b16 %v773, %v772
        %v786 = vpack.c.b16 %v775, %v774
        %v787 = vpack.c.b16 %v777, %v776
        %v788 = vpack.c.b16 %v779, %v778
        %v789 = vpack.c.b16 %v781, %v780
        %798 = vmatpush.bf16.msra.mxu0 %v789
        %799 = vmatpush.bf16.msra.mxu0 %v788
        %800 = vmatpush.bf16.msra.mxu0 %v787
        %801 = vmatpush.bf16.msra.mxu0 %v786
        %802 = vmatpush.bf16.msra.mxu0 %v785
        %803 = vmatpush.bf16.msra.mxu0 %v784
        %804 = vmatpush.bf16.msra.mxu0 %v783
        %805 = vmatpush.bf16.msra.mxu0 %v782
        %806 = vmatmul.bf16.gmra.mxu0 %v412
        %v807 = vpop.f32.mrf.mxu0
        %v808 = vadd.f32 %v749, %v807
        %v809 = vpop.f32.mrf.mxu0
        %810 = vdwg.mxu0
        %s811 = scalar_lea.vmem %s4, 128
        %v812 = vld [vmem:[%s811] sm:$0xf]
        %v813 = vld [vmem:[%s811 + $0x4] sm:$0xf]
        %v814 = vld [vmem:[%s811 + $0x8] sm:$0xf]
        %v815 = vld [vmem:[%s811 + $0xc] sm:$0xf]
        %v816 = vld [vmem:[%s811 + $0x10] sm:$0xf]
        %v817 = vld [vmem:[%s811 + $0x14] sm:$0xf]
        %v818 = vld [vmem:[%s811 + $0x18] sm:$0xf]
        %v819 = vld [vmem:[%s811 + $0x1c] sm:$0xf]
        %v820 = vld [vmem:[%s811 + $0x20] sm:$0xf]
        %v821 = vld [vmem:[%s811 + $0x24] sm:$0xf]
        %v822 = vld [vmem:[%s811 + $0x28] sm:$0xf]
        %v823 = vld [vmem:[%s811 + $0x2c] sm:$0xf]
        %v824 = vld [vmem:[%s811 + $0x30] sm:$0xf]
        %v825 = vld [vmem:[%s811 + $0x34] sm:$0xf]
        %v826 = vld [vmem:[%s811 + $0x38] sm:$0xf]
        %v827 = vld [vmem:[%s811 + $0x3c] sm:$0xf]
        %s828 = scalar_lea.vmem [#allocation8], 2
        %v829 = vld [vmem:[%s828] sm:$0x1]
        %v846 = vunpack.c.l.b16 %v812
        %v847 = vunpack.c.l.b16 %v813
        %v848 = vunpack.c.l.b16 %v814
        %v849 = vunpack.c.l.b16 %v815
        %v850 = vunpack.c.l.b16 %v816
        %v851 = vunpack.c.l.b16 %v817
        %v852 = vunpack.c.l.b16 %v818
        %v853 = vunpack.c.l.b16 %v819
        %v854 = vunpack.c.l.b16 %v820
        %v855 = vunpack.c.l.b16 %v821
        %v856 = vunpack.c.l.b16 %v822
        %v857 = vunpack.c.l.b16 %v823
        %v858 = vunpack.c.l.b16 %v824
        %v859 = vunpack.c.l.b16 %v825
        %v860 = vunpack.c.l.b16 %v826
        %v861 = vunpack.c.l.b16 %v827
        %v862 = vpack.c.b16 %v847, %v846
        %v863 = vpack.c.b16 %v849, %v848
        %v864 = vpack.c.b16 %v851, %v850
        %v865 = vpack.c.b16 %v853, %v852
        %v866 = vpack.c.b16 %v855, %v854
        %v867 = vpack.c.b16 %v857, %v856
        %v868 = vpack.c.b16 %v859, %v858
        %v869 = vpack.c.b16 %v861, %v860
        %878 = vmatpush.bf16.msra.mxu0 %v869
        %879 = vmatpush.bf16.msra.mxu0 %v868
        %880 = vmatpush.bf16.msra.mxu0 %v867
        %881 = vmatpush.bf16.msra.mxu0 %v866
        %882 = vmatpush.bf16.msra.mxu0 %v865
        %883 = vmatpush.bf16.msra.mxu0 %v864
        %884 = vmatpush.bf16.msra.mxu0 %v863
        %885 = vmatpush.bf16.msra.mxu0 %v862
        %886 = vmatmul.bf16.gmra.mxu0 %v414
        %v887 = vpop.f32.mrf.mxu0
        %v888 = vadd.f32 %v829, %v887
        %v889 = vpop.f32.mrf.mxu0
        %890 = vdwg.mxu0
        %v891 = vadd.f32 %v490, %v568
        %v892 = vxor.u32 %v891, 2147483648
        %v893 = vmul.f32 %v892, 1.442695
        %v894 = vpow.pop %v893
        %v895 = vadd.f32 %v894, 1.0
        %v896 = vrcp.pop %v895
        %v897 = vmul.f32 %v895, %v896
        %v898 = vsub.f32 1.0, %v897
        %v899 = vmul.f32 %v896, %v898
        %v900 = vadd.f32 %v896, %v899
        %vm901 = vweird.f32 %v895
        %vm902 = vweird.f32 %v896
        %vm903 = vmor %vm901, %vm902
        %v904 = vsel %vm903, %v896, %v900
        %v905 = vand.u32 2147483647, %v895
        %vm906 = vcmp.eq.f32.partialorder %v905, 8.507059e+37
        %v907 = vand.u32 %v895, 2147483648
        %v908 = vor.u32 1.1754944e-38, %v907
        %v909 = vsel %vm906, %v908, %v904
        %v910 = vmul.f32 1.0, %v909
        %v911 = vadd.f32 %v648, %v728
        %v912 = vxor.u32 %v911, 2147483648
        %v913 = vmul.f32 %v912, 1.442695
        %v914 = vpow.pop %v913
        %v915 = vadd.f32 %v914, 1.0
        %v916 = vrcp.pop %v915
        %v917 = vmul.f32 %v915, %v916
        %v918 = vsub.f32 1.0, %v917
        %v919 = vmul.f32 %v916, %v918
        %v920 = vadd.f32 %v916, %v919
        %vm921 = vweird.f32 %v915
        %vm922 = vweird.f32 %v916
        %vm923 = vmor %vm921, %vm922
        %v924 = vsel %vm923, %v916, %v920
        %v925 = vand.u32 2147483647, %v915
        %vm926 = vcmp.eq.f32.partialorder %v925, 8.507059e+37
        %v927 = vand.u32 %v915, 2147483648
        %v928 = vor.u32 1.1754944e-38, %v927
        %v929 = vsel %vm926, %v928, %v924
        %v930 = vmul.f32 1.0, %v929
        %v931 = vmul.f32 %v910, %v888
        %v932 = vadd.f32 %v808, %v931
        %v933 = vtanh.pop %v932
        %v934 = vsub.f32 1.0, %v930
        %v935 = vmul.f32 %v934, %v933
        %v936 = vmul.f32 %v930, %v413
        %v937 = vadd.f32 %v935, %v936
        %938 = vst [vmem:[#allocation2] sm:$0x1] %v937
        %939 = vst [vmem:[#allocation14] sm:$0x1] %v937
        %v940 = vpack.c.bf16 %v937, %v937
        %v941 = vld [vmem:[#allocation10] sm:$0xff]
        %v942 = vld [vmem:[#allocation10 + $0x8] sm:$0xff]
        %v943 = vld [vmem:[#allocation10 + $0x10] sm:$0xff]
        %v944 = vld [vmem:[#allocation10 + $0x18] sm:$0xff]
        %v945 = vld [vmem:[#allocation10 + $0x20] sm:$0xff]
        %v946 = vld [vmem:[#allocation10 + $0x28] sm:$0xff]
        %v947 = vld [vmem:[#allocation10 + $0x30] sm:$0xff]
        %v948 = vld [vmem:[#allocation10 + $0x38] sm:$0xff]
        %v949 = vld [vmem:[#allocation10 + $0x40] sm:$0xff]
        %v950 = vld [vmem:[#allocation10 + $0x48] sm:$0xff]
        %v951 = vld [vmem:[#allocation10 + $0x50] sm:$0xff]
        %v952 = vld [vmem:[#allocation10 + $0x58] sm:$0xff]
        %v953 = vld [vmem:[#allocation10 + $0x60] sm:$0xff]
        %v954 = vld [vmem:[#allocation10 + $0x68] sm:$0xff]
        %v955 = vld [vmem:[#allocation10 + $0x70] sm:$0xff]
        %v956 = vld [vmem:[#allocation10 + $0x78] sm:$0xff]
        %v957 = vld [vmem:[#allocation11] sm:$0x3]
        %v974 = vunpack.c.l.b16 %v941
        %v975 = vunpack.c.h.b16 %v941
        %v976 = vunpack.c.l.b16 %v942
        %v977 = vunpack.c.h.b16 %v942
        %v978 = vunpack.c.l.b16 %v943
        %v979 = vunpack.c.h.b16 %v943
        %v980 = vunpack.c.l.b16 %v944
        %v981 = vunpack.c.h.b16 %v944
        %v982 = vunpack.c.l.b16 %v945
        %v983 = vunpack.c.h.b16 %v945
        %v984 = vunpack.c.l.b16 %v946
        %v985 = vunpack.c.h.b16 %v946
        %v986 = vunpack.c.l.b16 %v947
        %v987 = vunpack.c.h.b16 %v947
        %v988 = vunpack.c.l.b16 %v948
        %v989 = vunpack.c.h.b16 %v948
        %v990 = vunpack.c.l.b16 %v949
        %v991 = vunpack.c.h.b16 %v949
        %v992 = vunpack.c.l.b16 %v950
        %v993 = vunpack.c.h.b16 %v950
        %v994 = vunpack.c.l.b16 %v951
        %v995 = vunpack.c.h.b16 %v951
        %v996 = vunpack.c.l.b16 %v952
        %v997 = vunpack.c.h.b16 %v952
        %v998 = vunpack.c.l.b16 %v953
        %v999 = vunpack.c.h.b16 %v953
        %v1000 = vunpack.c.l.b16 %v954
        %v1001 = vunpack.c.h.b16 %v954
        %v1002 = vunpack.c.l.b16 %v955
        %v1003 = vunpack.c.h.b16 %v955
        %v1004 = vunpack.c.l.b16 %v956
        %v1005 = vunpack.c.h.b16 %v956
        %v1006 = vpack.c.b16 %v976, %v974
        %v1007 = vpack.c.b16 %v977, %v975
        %v1008 = vpack.c.b16 %v980, %v978
        %v1009 = vpack.c.b16 %v981, %v979
        %v1010 = vpack.c.b16 %v984, %v982
        %v1011 = vpack.c.b16 %v985, %v983
        %v1012 = vpack.c.b16 %v988, %v986
        %v1013 = vpack.c.b16 %v989, %v987
        %v1014 = vpack.c.b16 %v992, %v990
        %v1015 = vpack.c.b16 %v993, %v991
        %v1016 = vpack.c.b16 %v996, %v994
        %v1017 = vpack.c.b16 %v997, %v995
        %v1018 = vpack.c.b16 %v1000, %v998
        %v1019 = vpack.c.b16 %v1001, %v999
        %v1020 = vpack.c.b16 %v1004, %v1002
        %v1021 = vpack.c.b16 %v1005, %v1003
        %v1039 = vperm.slane %v957, 0
        %v1040 = vperm.slane %v957, 1
        %1043 = vmatpush.bf16.msra.mxu0 %v1020
        %1044 = vmatpush.bf16.msra.mxu0 %v1018
        %1045 = vmatpush.bf16.msra.mxu0 %v1016
        %1046 = vmatpush.bf16.msra.mxu0 %v1014
        %1047 = vmatpush.bf16.msra.mxu0 %v1012
        %1048 = vmatpush.bf16.msra.mxu0 %v1010
        %1049 = vmatpush.bf16.msra.mxu0 %v1008
        %1050 = vmatpush.bf16.msra.mxu0 %v1006
        %1051 = vmatmul.bf16.gmra.mxu0 %v940
        %v1052 = vpop.f32.mrf.mxu0
        %v1053 = vadd.f32 %v1039, %v1052
        %v1054 = vpop.f32.mrf.mxu0
        %1055 = vdwg.mxu0
        %1056 = vmatpush.bf16.msra.mxu0 %v1021
        %1057 = vmatpush.bf16.msra.mxu0 %v1019
        %1058 = vmatpush.bf16.msra.mxu0 %v1017
        %1059 = vmatpush.bf16.msra.mxu0 %v1015
        %1060 = vmatpush.bf16.msra.mxu0 %v1013
        %1061 = vmatpush.bf16.msra.mxu0 %v1011
        %1062 = vmatpush.bf16.msra.mxu0 %v1009
        %1063 = vmatpush.bf16.msra.mxu0 %v1007
        %1064 = vmatmul.bf16.gmra.mxu0 %v940
        %v1065 = vpop.f32.mrf.mxu0
        %v1066 = vadd.f32 %v1040, %v1065
        %v1067 = vpop.f32.mrf.mxu0
        %1068 = vdwg.mxu0
        %vm1069 = vcmask 1040384
        %v1070 = vsel %vm1069, %v1053, -inf
        %v1071 = vsel %vm1069, %v1066, -inf
        %v1072 = vmax.f32 %v1070, %v1071
        %1073 = vmax.xlane.f32.xlu0 %v1072
        %v1074 = vpop.xlane.xlu0 %1073
        %v1075 = vsub.f32 %v1053, %v1074
        %v1076 = vsub.f32 %v1066, %v1074
        %v1077 = vmul.f32 %v1075, 1.442695
        %v1078 = vpow.pop %v1077
        %v1079 = vmul.f32 %v1076, 1.442695
        %v1080 = vpow.pop %v1079
        %v1081 = vsel %vm1069, %v1078, 0.0
        %v1082 = vsel %vm1069, %v1080, 0.0
        %v1083 = vadd.f32 %v1081, %v1082
        %1084 = vadd.xlane.f32.xlu0 %v1083
        %v1085 = vpop.xlane.xlu0 %1084
        %v1086 = vlog2.pop %v1085
        %v1087 = vmul.f32 %v1086, 0.6931472
        %v1088 = vsub.f32 %v1075, %v1087
        %v1089 = vsub.f32 %v1076, %v1087
        %v1092 = vrot.slane %v1089, 7
        %v1093 = vsel %vm1069, %v1088, %v1092
        %v1095 = vlaneseq
        %vm1096 = vcmp.ge.s32.totalorder %v1095, 0
        %vm1097 = vcmp.lt.s32.totalorder %v1095, 256
        %vm1098 = vmand %vm1096, %vm1097
        %1099 = vst.msk [vmem:[%s395] sm:$0x3] %vm1098, %v1093
        %s1100 = sand.u32 %s220, 1
        %s1101 = scalar_lea.sflag [#allocation7], %s1100
        %s1102 = sand.u32 %s220, 1
        %s1103 = smul.addr %s1102, 2
        %s1104 = scalar_lea.vmem [#allocation13], %s1103
        // Predicated region
        $region73: #{tpu_custom_call.1} parent=51 // pred_check
          %p1105 = pneg %p230
        $region74: #{tpu_custom_call.1} parent=51 // pred_check_branch
          %1107 = sbr.rel (%p1105) target = $region76
        $region75: #{tpu_custom_call.1} parent=51 // pred_region
          %1109 = vsyncadd %s1101, 0
          %s1110 = smul.addr %s37, 2
          %s1111 = scalar_lea.hbm %s9, %s1110
          %s1113 = sshll.u32 %s1104, 4
          %s1114 = int_to_ptr.vmem [resolvable:$true] %s1113
          %s1115 = sshll.u32 %s1111, 4
          %s1116 = int_to_ptr.hbm [resolvable:$true] %s1115
          %1118 = dma.vmem_to_hbm [thread:$0]  %s1114, 32, %s1116, %s1101
        $region76: #{tpu_custom_call.1} parent=51 // pred_fallthru
          _
        // Predicated region
        $region77: #{tpu_custom_call.1} parent=51 // pred_check
          %p1119 = pneg %p251
        $region78: #{tpu_custom_call.1} parent=51 // pred_check_branch
          %1121 = sbr.rel (%p1119) target = $region80
        $region79: #{tpu_custom_call.1} parent=51 // pred_region
          %1123 = vsyncadd [#allocation15], 0
          %s1125 = sshll.u32 [#allocation14], 4
          %s1126 = int_to_ptr.vmem [resolvable:$true] %s1125
          %s1127 = sshll.u32 %s10, 4
          %s1128 = int_to_ptr.hbm [resolvable:$true] %s1127
          %1130 = dma.vmem_to_hbm [thread:$0]  %s1126, 16, %s1128, [#allocation15]
        $region80: #{tpu_custom_call.1} parent=51 // pred_fallthru
          _
        // Predicated region
        $region81: #{tpu_custom_call.1} parent=51 // pred_check
          %p1131 = pneg %p251
        $region82: #{tpu_custom_call.1} parent=51 // pred_check_branch
          %1133 = sbr.rel (%p1131) target = $region84
        $region83: #{tpu_custom_call.1} parent=51 // pred_region
          %1135 = dma.done [#allocation15], 16
        $region84: #{tpu_custom_call.1} parent=51 // pred_fallthru
          _
      $region52: #{tpu_custom_call.1} parent=5 // pred_fallthru
        _
      %p1136 = scmp.le.s32.totalorder 2, %s32
      // Predicated region
      $region85: #{tpu_custom_call.1} parent=5 // pred_check
        %p1137 = pneg %p1136
      $region86: #{tpu_custom_call.1} parent=5 // pred_check_branch
        %1139 = sbr.rel (%p1137) target = $region88
      $region87: #{tpu_custom_call.1} parent=5 // pred_region
        %s1140 = ssub.s32 %s32, 2
        // Predicated region
        $region89: #{tpu_custom_call.1} parent=87 // pred_check
          %p1141 = pneg %p236
        $region90: #{tpu_custom_call.1} parent=87 // pred_check_branch
          %1143 = sbr.rel (%p1141) target = $region92
        $region91: #{tpu_custom_call.1} parent=87 // pred_region
          %s1144 = sand.u32 %s221, 1
          %s1145 = scalar_lea.sflag [#allocation7], %s1144
          %s1146 = sand.u32 %s221, 1
          %s1147 = smul.addr %s1146, 2
          %s1148 = scalar_lea.vmem [#allocation13], %s1147
          %1150 = dma.done %s1145, 32
        $region92: #{tpu_custom_call.1} parent=87 // pred_fallthru
          _
      $region88: #{tpu_custom_call.1} parent=5 // pred_fallthru
        _
    $region6: #{tpu_custom_call.1} parent=1 // loop_footer
      %s36 = sadd.s32 1, %s32
    $region7: #{tpu_custom_call.1} parent=1 // loop_footer_branch
      %31 = sbr.rel target = $region3
    $region8: #{tpu_custom_call.1} parent=1 // loop_exit
      _
    %1151 = vsyncpa [#allocation6], 1
    %s1152 = scalar_lea.sflag [#allocation6], 1
    %1153 = vsyncpa %s1152, 1
    %1154 = vsyncpa [#allocation9], 1
    %1155 = vsyncpa [#allocation12], 1
    %1156 = vsyncpa [#allocation7], 1
    %s1157 = scalar_lea.sflag [#allocation7], 1
    %1158 = vsyncpa %s1157, 1
    %1159 = vsyncpa [#allocation15], 1

</llo_original>
